<compile_context>
chip_gen: v6e
topology: v6e:2x2x1
jax: 0.10.0
libtpu: 0.0.40
codegen_flags: <defaults>
</compile_context>

<pallas_src>
import jax
import jax.numpy as jnp
from jax import lax
from jax.experimental import pallas as pl
from jax.experimental.pallas import tpu as pltpu


def _spatial_gather_kernel(probs_ref, feats_ref, out_ref, m_sc, l_sc, acc_sc):
    # probs_ref: (1, K, tN)   logits tile (softmaxed over N online)
    # feats_ref: (1, tC, tN)  native dtype, lane axis = N
    # out_ref:   (1, tC, K)
    # m_sc/l_sc: (K, 1) f32   running max / running softmax denominator
    # acc_sc:    (tC, K) f32  running un-normalized context
    n = pl.program_id(2)

    @pl.when(n == 0)
    def _init():
        m_sc[...] = jnp.full_like(m_sc, -jnp.inf)
        l_sc[...] = jnp.zeros_like(l_sc)
        acc_sc[...] = jnp.zeros_like(acc_sc)

    p = probs_ref[0].astype(jnp.float32)                       # (K, tN)
    f = feats_ref[0]                                           # (tC, tN) native dtype

    m_prev = m_sc[...]                                         # (K, 1)
    m_new = jnp.maximum(m_prev, jnp.max(p, axis=-1, keepdims=True))
    alpha = jnp.exp(m_prev - m_new)                            # (K, 1) history rescale
    e = jnp.exp(p - m_new)                                     # (K, tN) un-normalized softmax

    l_sc[...] = alpha * l_sc[...] + jnp.sum(e, axis=-1, keepdims=True)

    # (tC, tN) x (K, tN) contracting on N -> (tC, K) on the MXU, f32 accumulate.
    contrib = lax.dot_general(
        f, e.astype(f.dtype),
        dimension_numbers=(((1,), (1,)), ((), ())),
        preferred_element_type=jnp.float32)
    acc_sc[...] = acc_sc[...] * alpha.T + contrib
    m_sc[...] = m_new

    @pl.when(n == pl.num_programs(2) - 1)
    def _finalize():
        # Normalize once, after the matmul (K*C multiplies instead of K*N).
        # Exact reciprocal: the operand is a tiny (K, 1) vector, cost is nil.
        inv_l = pl.reciprocal(l_sc[...], approx=False)         # (K, 1)
        out_ref[0] = (acc_sc[...] * inv_l.T).astype(out_ref.dtype)


def _pick_tile(total, target, align):
    """Largest multiple of `align` dividing `total` that is <= target, else `total`."""
    if total <= target or total % align != 0:
        return total
    t = (target // align) * align
    while t >= align:
        if total % t == 0:
            return t
        t -= align
    return total


def spatial_gather(feats, probs, *, n_tile=None, c_tile=None):
    """feats: (B, C, H, W), probs: (B, K, H, W) -> (B, C, K, 1)."""
    B, C, H, W = feats.shape
    Bp, K, Hp, Wp = probs.shape
    assert B == Bp and (H, W) == (Hp, Wp)
    N = H * W

    probs_flat = probs.reshape(B, K, N)
    feats_flat = feats.reshape(B, C, N)          # keep (C, N): no HBM transpose

    tN = _pick_tile(N, 2048, 128) if n_tile is None else n_tile
    tC = _pick_tile(C, 256, 8) if c_tile is None else c_tile
    assert N % tN == 0 and (tN == N or tN % 128 == 0), (N, tN)
    assert C % tC == 0 and (tC == C or tC % 8 == 0), (C, tC)

    out_dtype = feats.dtype
    grid = (B, C // tC, N // tN)

    # Scoped-VMEM budget: double-buffered input tiles + output tile + scratch
    # + in-kernel temporaries, with headroom; never below the 32 MiB default,
    # capped at 64 MiB (v7x physical VMEM per TC).
    def _isz(dt):
        return jnp.dtype(dt).itemsize

    blk_bytes = (2 * (K * tN * _isz(probs.dtype) + tC * tN * _isz(feats.dtype))
                 + 2 * tC * K * _isz(out_dtype)
                 + 4 * (tC * K + 2 * K + K * tN))
    vmem_limit = int(min(64 * 1024 * 1024, max(32 * 1024 * 1024, 2 * blk_bytes)))

    out = pl.pallas_call(
        _spatial_gather_kernel,
        out_shape=jax.ShapeDtypeStruct((B, C, K), out_dtype),
        grid_spec=pltpu.PrefetchScalarGridSpec(
            num_scalar_prefetch=0,
            grid=grid,
            in_specs=[
                pl.BlockSpec((1, K, tN), lambda b, c, n: (b, 0, n)),
                pl.BlockSpec((1, tC, tN), lambda b, c, n: (b, c, n)),
            ],
            out_specs=pl.BlockSpec((1, tC, K), lambda b, c, n: (b, c, 0)),
            scratch_shapes=[
                pltpu.VMEM((K, 1), jnp.float32),      # running max
                pltpu.VMEM((K, 1), jnp.float32),      # running denominator
                pltpu.VMEM((tC, K), jnp.float32),     # running context accumulator
            ],
        ),
        compiler_params=pltpu.CompilerParams(
            # B / C-tiles independent (megacore-shardable); N carries the
            # online-softmax reduction, so it is "arbitrary" and innermost.
            dimension_semantics=("parallel", "parallel", "arbitrary"),
            vmem_limit_bytes=vmem_limit,
        ),
    )(probs_flat, feats_flat)

    # (B, C, K) -> (B, C, K, 1): matches torch's .permute(0, 2, 1).unsqueeze(3).
    return out[..., None]


def spatial_gather_reference(feats, probs):
    B, C, H, W = feats.shape
    K = probs.shape[1]
    N = H * W
    p = jax.nn.softmax(probs.reshape(B, K, N).astype(jnp.float32), axis=2)
    f = feats.reshape(B, C, N).astype(jnp.float32)
    out = jnp.einsum("bkn,bcn->bck", p, f)
    return out[..., None].astype(feats.dtype)


if __name__ == "__main__":
    # TODO(synk): only SpatialGather_Module is kernelized; the surrounding Unet
    # conv/BN/upsample backbone (EfficientNet encoder, OCR convs) stays in XLA.
    key = jax.random.PRNGKey(0)
    k1, k2 = jax.random.split(key)

    B, C, H, W = 2, 4, 16, 16   # feats channels
    K = 8                       # cls_num (number of classes in probs)

    feats = jax.random.normal(k1, (B, C, H, W), dtype=jnp.float32)
    probs = jax.random.normal(k2, (B, K, H, W), dtype=jnp.float32)

    ref = spatial_gather_reference(feats, probs)

    # Auto-tiled path (single N tile at this small size).
    out = spatial_gather(feats, probs)
    jax.block_until_ready(out)
    assert out.shape == (B, C, K, 1), out.shape
    assert jnp.allclose(out, ref, atol=1e-5, rtol=1e-5), "mismatch (auto tiles)"

    # Force multiple N tiles to exercise the online-softmax accumulation path.
    out_tiled = spatial_gather(feats, probs, n_tile=128)
    jax.block_until_ready(out_tiled)
    assert jnp.allclose(out_tiled, ref, atol=1e-5, rtol=1e-5), "mismatch (N-tiled)"

    print("KERNEL_OK")
</pallas_src>

<mosaic_0001>
module attributes {stable_mosaic.version = 11 : i64} {
  func.func @_spatial_gather_kernel(%arg0: i32, %arg1: i32, %arg2: i32, %arg3: memref<1x8x256xf32, #tpu.memory_space<vmem>>, %arg4: memref<1x4x256xf32, #tpu.memory_space<vmem>>, %arg5: memref<1x4x8xf32, #tpu.memory_space<vmem>>, %arg6: memref<8x1xf32, #tpu.memory_space<vmem>>, %arg7: memref<8x1xf32, #tpu.memory_space<vmem>>, %arg8: memref<4x8xf32, #tpu.memory_space<vmem>>) attributes {dimension_semantics = [#tpu.dimension_semantics<parallel>, #tpu.dimension_semantics<parallel>, #tpu.dimension_semantics<arbitrary>], iteration_bounds = array<i64: 2, 1, 1>, scalar_prefetch = 0 : i64, scratch_operands = 3 : i64, tpu.core_type = #tpu.core_type<tc>, window_params = [{transform_indices = @transform_0, window_bounds = array<i64: 1, 8, 256>}, {transform_indices = @transform_1, window_bounds = array<i64: 1, 4, 256>}, {transform_indices = @transform_2, window_bounds = array<i64: 1, 4, 8>}]} {
    %c0_i32 = arith.constant 0 : i32
    %0 = arith.cmpi eq, %arg2, %c0_i32 : i32
    %1 = arith.extui %0 : i1 to i32
    %c0_i32_0 = arith.constant 0 : i32
    %2 = arith.cmpi ne, %1, %c0_i32_0 : i32
    scf.if %2 {
      %cst_22 = arith.constant 0xFF800000 : f32
      %33 = vector.broadcast %cst_22 : f32 to vector<8x1xf32>
      %c0_23 = arith.constant 0 : index
      %c0_24 = arith.constant 0 : index
      %34 = vector.load %arg6[%c0_23, %c0_24] : memref<8x1xf32, #tpu.memory_space<vmem>>, vector<8x1xf32>
      tpu.vector_store %arg6[%c0_23, %c0_24], %33 {strides = array<i32>} : memref<8x1xf32, #tpu.memory_space<vmem>>, vector<8x1xf32>,
      %cst_25 = arith.constant 0.000000e+00 : f32
      %35 = vector.broadcast %cst_25 : f32 to vector<8x1xf32>
      %c0_26 = arith.constant 0 : index
      %c0_27 = arith.constant 0 : index
      %36 = vector.load %arg7[%c0_26, %c0_27] : memref<8x1xf32, #tpu.memory_space<vmem>>, vector<8x1xf32>
      tpu.vector_store %arg7[%c0_26, %c0_27], %35 {strides = array<i32>} : memref<8x1xf32, #tpu.memory_space<vmem>>, vector<8x1xf32>,
      %cst_28 = arith.constant 0.000000e+00 : f32
      %37 = vector.broadcast %cst_28 : f32 to vector<4x8xf32>
      %c0_29 = arith.constant 0 : index
      %c0_30 = arith.constant 0 : index
      %38 = vector.load %arg8[%c0_29, %c0_30] : memref<4x8xf32, #tpu.memory_space<vmem>>, vector<4x8xf32>
      tpu.vector_store %arg8[%c0_29, %c0_30], %37 {strides = array<i32>} : memref<4x8xf32, #tpu.memory_space<vmem>>, vector<4x8xf32>,
    } else {
    }
    %c0 = arith.constant 0 : index
    %c0_1 = arith.constant 0 : index
    %c0_2 = arith.constant 0 : index
    %3 = vector.load %arg3[%c0, %c0_1, %c0_2] : memref<1x8x256xf32, #tpu.memory_space<vmem>>, vector<1x8x256xf32>
    %4 = vector.shape_cast %3 : vector<1x8x256xf32> to vector<8x256xf32>
    %c0_3 = arith.constant 0 : index
    %c0_4 = arith.constant 0 : index
    %c0_5 = arith.constant 0 : index
    %5 = vector.load %arg4[%c0_3, %c0_4, %c0_5] : memref<1x4x256xf32, #tpu.memory_space<vmem>>, vector<1x4x256xf32>
    %6 = vector.shape_cast %5 : vector<1x4x256xf32> to vector<4x256xf32>
    %c0_6 = arith.constant 0 : index
    %c0_7 = arith.constant 0 : index
    %7 = vector.load %arg6[%c0_6, %c0_7] : memref<8x1xf32, #tpu.memory_space<vmem>>, vector<8x1xf32>
    %cst = arith.constant dense<0xFF800000> : vector<8xf32>
    %8 = vector.multi_reduction <maximumf>, %4, %cst [1] : vector<8x256xf32> to vector<8xf32>
    %9 = vector.shape_cast %8 : vector<8xf32> to vector<8x1xf32>
    %10 = arith.maximumf %7, %9 : vector<8x1xf32>
    %11 = arith.subf %7, %10 : vector<8x1xf32>
    %12 = math.exp %11 : vector<8x1xf32>
    %13 = vector.broadcast %10 : vector<8x1xf32> to vector<8x256xf32>
    %14 = arith.subf %4, %13 : vector<8x256xf32>
    %15 = math.exp %14 : vector<8x256xf32>
    %c0_8 = arith.constant 0 : index
    %c0_9 = arith.constant 0 : index
    %16 = vector.load %arg7[%c0_8, %c0_9] : memref<8x1xf32, #tpu.memory_space<vmem>>, vector<8x1xf32>
    %17 = arith.mulf %12, %16 : vector<8x1xf32>
    %cst_10 = arith.constant dense<0.000000e+00> : vector<8xf32>
    %18 = vector.multi_reduction <add>, %15, %cst_10 [1] : vector<8x256xf32> to vector<8xf32>
    %19 = vector.shape_cast %18 : vector<8xf32> to vector<8x1xf32>
    %20 = arith.addf %17, %19 : vector<8x1xf32>
    %c0_11 = arith.constant 0 : index
    %c0_12 = arith.constant 0 : index
    %21 = vector.load %arg7[%c0_11, %c0_12] : memref<8x1xf32, #tpu.memory_space<vmem>>, vector<8x1xf32>
    tpu.vector_store %arg7[%c0_11, %c0_12], %20 {strides = array<i32>} : memref<8x1xf32, #tpu.memory_space<vmem>>, vector<8x1xf32>,
    %cst_13 = arith.constant dense<0.000000e+00> : vector<4x8xf32>
    %22 = tpu.matmul %6, %15, %cst_13 {dimension_numbers = #tpu.dot_dimension_numbers<[1], [1], [0], [0], [0, 0, 1, 0], [], []>} : vector<4x256xf32>, vector<8x256xf32>, vector<4x8xf32> -> vector<4x8xf32>
    %c0_14 = arith.constant 0 : index
    %c0_15 = arith.constant 0 : index
    %23 = vector.load %arg8[%c0_14, %c0_15] : memref<4x8xf32, #tpu.memory_space<vmem>>, vector<4x8xf32>
    %24 = tpu.transpose %12, [1, 0] : vector<8x1xf32> -> vector<1x8xf32>
    %25 = vector.broadcast %24 : vector<1x8xf32> to vector<4x8xf32>
    %26 = arith.mulf %23, %25 : vector<4x8xf32>
    %27 = arith.addf %26, %22 : vector<4x8xf32>
    %c0_16 = arith.constant 0 : index
    %c0_17 = arith.constant 0 : index
    %28 = vector.load %arg8[%c0_16, %c0_17] : memref<4x8xf32, #tpu.memory_space<vmem>>, vector<4x8xf32>
    tpu.vector_store %arg8[%c0_16, %c0_17], %27 {strides = array<i32>} : memref<4x8xf32, #tpu.memory_space<vmem>>, vector<4x8xf32>,
    %c0_18 = arith.constant 0 : index
    %c0_19 = arith.constant 0 : index
    %29 = vector.load %arg6[%c0_18, %c0_19] : memref<8x1xf32, #tpu.memory_space<vmem>>, vector<8x1xf32>
    tpu.vector_store %arg6[%c0_18, %c0_19], %10 {strides = array<i32>} : memref<8x1xf32, #tpu.memory_space<vmem>>, vector<8x1xf32>,
    %c0_i32_20 = arith.constant 0 : i32
    %30 = arith.cmpi eq, %arg2, %c0_i32_20 : i32
    %31 = arith.extui %30 : i1 to i32
    %c0_i32_21 = arith.constant 0 : i32
    %32 = arith.cmpi ne, %31, %c0_i32_21 : i32
    scf.if %32 {
      %c0_22 = arith.constant 0 : index
      %c0_23 = arith.constant 0 : index
      %33 = vector.load %arg7[%c0_22, %c0_23] : memref<8x1xf32, #tpu.memory_space<vmem>>, vector<8x1xf32>
      %34 = tpu.reciprocal %33 : vector<8x1xf32> -> vector<8x1xf32>
      %c0_24 = arith.constant 0 : index
      %c0_25 = arith.constant 0 : index
      %35 = vector.load %arg8[%c0_24, %c0_25] : memref<4x8xf32, #tpu.memory_space<vmem>>, vector<4x8xf32>
      %36 = tpu.transpose %34, [1, 0] : vector<8x1xf32> -> vector<1x8xf32>
      %37 = vector.broadcast %36 : vector<1x8xf32> to vector<4x8xf32>
      %38 = arith.mulf %35, %37 : vector<4x8xf32>
      %c0_26 = arith.constant 0 : index
      %c0_27 = arith.constant 0 : index
      %c0_28 = arith.constant 0 : index
      %39 = vector.load %arg5[%c0_26, %c0_27, %c0_28] : memref<1x4x8xf32, #tpu.memory_space<vmem>>, vector<1x4x8xf32>
      %40 = vector.shape_cast %39 : vector<1x4x8xf32> to vector<4x8xf32>
      %41 = vector.shape_cast %38 : vector<4x8xf32> to vector<1x4x8xf32>
      tpu.vector_store %arg5[%c0_26, %c0_27, %c0_28], %41 {strides = array<i32>} : memref<1x4x8xf32, #tpu.memory_space<vmem>>, vector<1x4x8xf32>,
    } else {
    }
    return
  }
  func.func @transform_0(%arg0: i32, %arg1: i32, %arg2: i32) -> (i32, i32, i32) {
    %c0_i32 = arith.constant 0 : i32
    %c0_i32_0 = arith.constant 0 : i32
    return %arg0, %c0_i32, %arg2 : i32, i32, i32
  }
  func.func @transform_1(%arg0: i32, %arg1: i32, %arg2: i32) -> (i32, i32, i32) {
    %c0_i32 = arith.constant 0 : i32
    return %arg0, %arg1, %arg2 : i32, i32, i32
  }
  func.func @transform_2(%arg0: i32, %arg1: i32, %arg2: i32) -> (i32, i32, i32) {
    %c0_i32 = arith.constant 0 : i32
    %c0_i32_0 = arith.constant 0 : i32
    return %arg0, %arg1, %c0_i32 : i32, i32, i32
  }
}

</mosaic_0001>

<llo_original>
// kernel: tpu_custom_call.1
$region0: #{tpu_custom_call.1}
  #allocation0 [shape = 'u32[]', space=smem, size = 0x4, offset = 0x4, fixed_abs, tag = 'smem constant byte address 0x4 - core index']
  #allocation1 [shape = 'u32[144,128]{1,0:T(1,128)}', space=vmem, size = 0x12000, scoped, tag = 'internal scratch']
  #allocation2 [shape = 'f32[8,1]{1,0:T(8,128)}', space=vmem, size = 0x1000, scoped, tag = 'scratch operand']
  #allocation3 [shape = 'f32[8,1]{1,0:T(8,128)}', space=vmem, size = 0x1000, scoped, tag = 'scratch operand']
  #allocation4 [shape = 'f32[4,8]{1,0:T(4,128)}', space=vmem, size = 0x800, scoped, tag = 'scratch operand']
  %s0 = inlined_call_operand.hbm [shape: f32[2,8,256], index: 0, kind: input, shape index: {}]
  %s1 = inlined_call_operand.hbm [shape: f32[2,4,256], index: 1, kind: input, shape index: {}]
  %s2 = inlined_call_operand.hbm [shape: f32[2,4,8], index: 2, kind: output, shape index: {}]
  %s3 = sld [smem:[#allocation0]]
  $region57: #{tpu_custom_call.1} parent=0
    _
  %s5 = ssub.s32 1, %s3
  %s6 = scalar_select 0, %s5, %s3
  $region1: #{tpu_custom_call.1} parent=0
    #allocation5 [shape = 'u8[16384]{0}', space=vmem, size = 0x4000, scoped, tag = 'input window, operand 0']
    #allocation6 [shape = 's32[2]{0}', space=sflag, size = 0x8, scoped, tag = 'scoped memory for tpu_custom_call.1']
    #allocation7 [shape = 's32[2]{0}', space=sflag, size = 0x8, scoped, tag = 'scoped memory for tpu_custom_call.1']
    #allocation8 [shape = 'u8[8192]{0}', space=vmem, size = 0x2000, scoped, tag = 'input window, operand 1']
    #allocation9 [shape = 's32[2]{0}', space=sflag, size = 0x8, scoped, tag = 'scoped memory for tpu_custom_call.1']
    #allocation10 [shape = 'u8[4096]{0}', space=vmem, size = 0x1000, scoped, tag = 'output window, operand 0']
    %7 = vsyncpa [#allocation6], 0
    %s8 = scalar_lea.sflag [#allocation6], 1
    %9 = vsyncpa %s8, 0
    %10 = vsyncpa [#allocation9], 0
    %s11 = scalar_lea.sflag [#allocation9], 1
    %12 = vsyncpa %s11, 0
    %13 = vsyncpa [#allocation7], 0
    %s14 = scalar_lea.sflag [#allocation7], 1
    %15 = vsyncpa %s14, 0
    loop: start=0, step=1, limit=4
    $region2: #{tpu_custom_call.1} parent=1 // loop_pre_header
      _
    $region3: #{tpu_custom_call.1} parent=1 // loop_header
      %s17 = sphi 0, %s21
      %p18 = scmp.ge.s32.totalorder %s17, 4
      %s24 = sphi 0, %s43
      %s25 = sphi 0, %s39
      %s26 = sphi 0, %s35
      %s27 = sphi 0, %s24
      %s28 = sphi 0, %s25
      %s29 = sphi 0, %s26
      %s30 = sphi 0, %s27
      %s31 = sphi 0, %s28
      %s32 = sphi 0, %s29
      %s48 = sphi 0, %s50
      %s51 = sphi 0, %s48
      %s52 = sphi 0, %s51
      %s68 = sphi 0, %s52
      %s78 = sphi 0, %s80
      %s81 = sphi 0, %s78
      %s82 = sphi 0, %s81
      %s98 = sphi 0, %s82
      %s106 = sphi 0, %s108
      %s109 = sphi 0, %s106
      %s110 = sphi 0, %s109
      %s126 = sphi 0, %s110
    $region4: #{tpu_custom_call.1} parent=1 // loop_header_branch
      %20 = sbr.rel (%p18) target = $region8
    $region5: #{tpu_custom_call.1} parent=1 // loop_body
      %s22 = ssub.s32 %s17, 1
      %s23 = ssub.s32 %s17, 2
      %s33 = sadd.s32 1, %s26
      %p34 = scmp.ge.s32.totalorder %s33, 1
      %s35 = scalar_select %p34, 0, %s33
      %s36 = sadd.s32 1, %s25
      %s37 = scalar_select %p34, %s36, %s25
      %p38 = scmp.ge.s32.totalorder %s37, 1
      %s39 = scalar_select %p38, 0, %s37
      %s40 = sadd.s32 1, %s24
      %s41 = scalar_select %p38, %s40, %s24
      %p42 = scmp.ge.s32.totalorder %s41, 2
      %s43 = scalar_select %p42, 0, %s41
      %s44 = ssub.s32 %s24, %s43
      %s45 = ssub.s32 %s26, %s35
      %s46 = sor.u32 %s44, %s45
      %p47 = scmp.eq.s32.totalorder %s46, 0
      %s49 = sadd.s32 %s48, 1
      %s50 = scalar_select %p47, %s48, %s49
      %p53 = pneg %p47
      %p54 = scmp.eq.s32.totalorder %s17, 1
      %p55 = por %p53, %p54
      %p56 = scmp.ne.s32.totalorder %s48, %s51
      %p57 = scmp.eq.s32.totalorder %s17, 0
      %p58 = por %p56, %p57
      %p59 = scmp.ne.s32.totalorder %s48, %s51
      %p60 = scmp.eq.s32.totalorder %s22, 1
      %p61 = por %p59, %p60
      %p62 = scmp.ne.s32.totalorder %s51, %s52
      %p63 = scmp.eq.s32.totalorder %s22, 0
      %p64 = por %p62, %p63
      %p65 = scmp.ne.s32.totalorder %s51, %s52
      %p66 = scmp.eq.s32.totalorder %s23, 1
      %p67 = por %p65, %p66
      %p69 = scmp.ne.s32.totalorder %s52, %s68
      %p70 = scmp.eq.s32.totalorder %s23, 0
      %p71 = por %p69, %p70
      %s72 = ssub.s32 %s24, %s43
      %s73 = ssub.s32 %s25, %s39
      %s74 = sor.u32 %s72, %s73
      %s75 = ssub.s32 %s26, %s35
      %s76 = sor.u32 %s74, %s75
      %p77 = scmp.eq.s32.totalorder %s76, 0
      %s79 = sadd.s32 %s78, 1
      %s80 = scalar_select %p77, %s78, %s79
      %p83 = pneg %p77
      %p84 = scmp.eq.s32.totalorder %s17, 1
      %p85 = por %p83, %p84
      %p86 = scmp.ne.s32.totalorder %s78, %s81
      %p87 = scmp.eq.s32.totalorder %s17, 0
      %p88 = por %p86, %p87
      %p89 = scmp.ne.s32.totalorder %s78, %s81
      %p90 = scmp.eq.s32.totalorder %s22, 1
      %p91 = por %p89, %p90
      %p92 = scmp.ne.s32.totalorder %s81, %s82
      %p93 = scmp.eq.s32.totalorder %s22, 0
      %p94 = por %p92, %p93
      %p95 = scmp.ne.s32.totalorder %s81, %s82
      %p96 = scmp.eq.s32.totalorder %s23, 1
      %p97 = por %p95, %p96
      %p99 = scmp.ne.s32.totalorder %s82, %s98
      %p100 = scmp.eq.s32.totalorder %s23, 0
      %p101 = por %p99, %p100
      %s102 = ssub.s32 %s24, %s43
      %s103 = ssub.s32 %s25, %s39
      %s104 = sor.u32 %s102, %s103
      %p105 = scmp.eq.s32.totalorder %s104, 0
      %s107 = sadd.s32 %s106, 1
      %s108 = scalar_select %p105, %s106, %s107
      %p111 = pneg %p105
      %p112 = scmp.eq.s32.totalorder %s17, 1
      %p113 = por %p111, %p112
      %p114 = scmp.ne.s32.totalorder %s106, %s109
      %p115 = scmp.eq.s32.totalorder %s17, 0
      %p116 = por %p114, %p115
      %p117 = scmp.ne.s32.totalorder %s106, %s109
      %p118 = scmp.eq.s32.totalorder %s22, 1
      %p119 = por %p117, %p118
      %p120 = scmp.ne.s32.totalorder %s109, %s110
      %p121 = scmp.eq.s32.totalorder %s22, 0
      %p122 = por %p120, %p121
      %p123 = scmp.ne.s32.totalorder %s109, %s110
      %p124 = scmp.eq.s32.totalorder %s23, 1
      %p125 = por %p123, %p124
      %p127 = scmp.ne.s32.totalorder %s110, %s126
      %p128 = scmp.eq.s32.totalorder %s23, 0
      %p129 = por %p127, %p128
      %p130 = scmp.le.s32.totalorder 1, %s17
      %p131 = scmp.lt.s32.totalorder %s17, 3
      %p132 = pnand %p130, %p131
      %p133 = pneg %p132
      // Predicated region
      $region9: #{tpu_custom_call.1} parent=5 // pred_check
        _
      $region10: #{tpu_custom_call.1} parent=5 // pred_check_branch
        %135 = sbr.rel (%p132) target = $region12
      $region11: #{tpu_custom_call.1} parent=5 // pred_region
        %s136 = ssub.s32 %s17, 1
      $region12: #{tpu_custom_call.1} parent=5 // pred_fallthru
        _
      %p137 = scmp.lt.s32.totalorder %s17, 2
      // Predicated region
      $region13: #{tpu_custom_call.1} parent=5 // pred_check
        %p138 = pneg %p137
      $region14: #{tpu_custom_call.1} parent=5 // pred_check_branch
        %140 = sbr.rel (%p138) target = $region16
      $region15: #{tpu_custom_call.1} parent=5 // pred_region
        // Predicated region
        $region17: #{tpu_custom_call.1} parent=15 // pred_check
          %p141 = pneg %p58
        $region18: #{tpu_custom_call.1} parent=15 // pred_check_branch
          %143 = sbr.rel (%p141) target = $region20
        $region19: #{tpu_custom_call.1} parent=15 // pred_region
          %s144 = sand.u32 %s48, 1
          %s145 = scalar_lea.sflag [#allocation6], %s144
          %s146 = sand.u32 %s48, 1
          %s147 = smul.addr %s146, 16
          %s148 = scalar_lea.vmem [#allocation5], %s147
          %s149 = smul.u32 2, %s26
          %s151 = ssub.s32 256, 256
          %152 = vsyncadd %s145, %s151
          %s153 = smul.addr %s24, 2
          %s154 = sadd.s32 %s149, %s153
          %s155 = smul.addr %s154, 128
          %s156 = scalar_lea.hbm %s0, %s155
          %s158 = sshll.u32 %s148, 4
          %s159 = int_to_ptr.vmem [resolvable:$true] %s158
          %161 = dma.hbm_to_vmem [thread:$0]  %s156, 256, %s159, %s145
        $region20: #{tpu_custom_call.1} parent=15 // pred_fallthru
          _
        // Predicated region
        $region21: #{tpu_custom_call.1} parent=15 // pred_check
          %p162 = pneg %p88
        $region22: #{tpu_custom_call.1} parent=15 // pred_check_branch
          %164 = sbr.rel (%p162) target = $region24
        $region23: #{tpu_custom_call.1} parent=15 // pred_region
          %s165 = sand.u32 %s78, 1
          %s166 = scalar_lea.sflag [#allocation9], %s165
          %s167 = sand.u32 %s78, 1
          %s168 = smul.addr %s167, 8
          %s169 = scalar_lea.vmem [#allocation8], %s168
          %s170 = smul.u32 2, %s26
          %s172 = ssub.s32 128, 128
          %173 = vsyncadd %s166, %s172
          %s174 = smul.addr %s25, 2
          %s175 = sadd.s32 %s170, %s174
          %s176 = smul.addr %s24, 2
          %s177 = sadd.s32 %s175, %s176
          %s178 = smul.addr %s177, 64
          %s179 = scalar_lea.hbm %s1, %s178
          %s181 = sshll.u32 %s169, 4
          %s182 = int_to_ptr.vmem [resolvable:$true] %s181
          %184 = dma.hbm_to_vmem [thread:$0]  %s179, 128, %s182, %s166
        $region24: #{tpu_custom_call.1} parent=15 // pred_fallthru
          _
      $region16: #{tpu_custom_call.1} parent=5 // pred_fallthru
        _
      %p185 = scmp.le.s32.totalorder 1, %s17
      %p186 = scmp.lt.s32.totalorder %s17, 3
      %p187 = pnand %p185, %p186
      %p188 = pneg %p187
      // Predicated region
      $region25: #{tpu_custom_call.1} parent=5 // pred_check
        _
      $region26: #{tpu_custom_call.1} parent=5 // pred_check_branch
        %190 = sbr.rel (%p187) target = $region28
      $region27: #{tpu_custom_call.1} parent=5 // pred_region
        %s191 = ssub.s32 %s17, 1
        %s192 = sand.u32 %s51, 1
        %s193 = scalar_lea.sflag [#allocation6], %s192
        %s194 = sand.u32 %s51, 1
        %s195 = smul.addr %s194, 16
        %s196 = scalar_lea.vmem [#allocation5], %s195
        // Predicated region
        $region29: #{tpu_custom_call.1} parent=27 // pred_check
          %p197 = pneg %p64
        $region30: #{tpu_custom_call.1} parent=27 // pred_check_branch
          %199 = sbr.rel (%p197) target = $region32
        $region31: #{tpu_custom_call.1} parent=27 // pred_region
          %200 = dma.done %s193, 256
        $region32: #{tpu_custom_call.1} parent=27 // pred_fallthru
          _
        %s201 = sand.u32 %s81, 1
        %s202 = scalar_lea.sflag [#allocation9], %s201
        %s203 = sand.u32 %s81, 1
        %s204 = smul.addr %s203, 8
        %s205 = scalar_lea.vmem [#allocation8], %s204
        // Predicated region
        $region33: #{tpu_custom_call.1} parent=27 // pred_check
          %p206 = pneg %p94
        $region34: #{tpu_custom_call.1} parent=27 // pred_check_branch
          %208 = sbr.rel (%p206) target = $region36
        $region35: #{tpu_custom_call.1} parent=27 // pred_region
          %209 = dma.done %s202, 128
        $region36: #{tpu_custom_call.1} parent=27 // pred_fallthru
          _
        %s210 = sand.u32 %s51, 1
        %s211 = scalar_lea.sflag [#allocation6], %s210
        %s212 = sand.u32 %s51, 1
        %s213 = smul.addr %s212, 16
        %s214 = scalar_lea.vmem [#allocation5], %s213
        %p215 = pneg %p64
        %p216 = pneg %p61
        %s217 = sand.u32 %s81, 1
        %s218 = scalar_lea.sflag [#allocation9], %s217
        %s219 = sand.u32 %s81, 1
        %s220 = smul.addr %s219, 8
        %s221 = scalar_lea.vmem [#allocation8], %s220
        %p222 = pneg %p94
        %p223 = pneg %p91
        %p224 = pneg %p122
        %p225 = pneg %p119
        %s226 = sand.u32 %s109, 1
        %s227 = scalar_lea.sflag [#allocation7], %s226
        %s228 = sand.u32 %s109, 1
        %s229 = smul.addr %s228, 4
        %s230 = scalar_lea.vmem [#allocation10], %s229
        %s231 = smul.u32 2, %s29
        %s232 = smul.u32 2, %s29
        %p233 = scmp.eq.s32.totalorder %s29, 0
        // Predicated region
        $region37: #{tpu_custom_call.1} parent=27 // pred_check
          %p234 = pneg %p233
        $region38: #{tpu_custom_call.1} parent=27 // pred_check_branch
          %236 = sbr.rel (%p234) target = $region40
        $region39: #{tpu_custom_call.1} parent=27 // pred_region
          %vm237 = vcmask 7168
          %238 = vst.msk [vmem:[#allocation2] sm:$0xff] %vm237, -inf
          %239 = vst.msk [vmem:[#allocation3] sm:$0xff] %vm237, 0.0
          %vm240 = vcmask 60416
          %241 = vst.msk [vmem:[#allocation4] sm:$0xf] %vm240, 0.0
        $region40: #{tpu_custom_call.1} parent=27 // pred_fallthru
          _
        %v242 = vld [vmem:[%s196] sm:$0xff]
        %v243 = vld [vmem:[%s196 + $0x8] sm:$0xff]
        %v244 = vld [vmem:[%s205] sm:$0xff]
        %v245 = vld [vmem:[#allocation2] sm:$0xff]
        %v246 = vmax.f32 %v242, %v243
        %247 = vmax.xlane.f32.xlu0 %v246
        %v248 = vpop.xlane.xlu0 %247
        %v249 = vmax.f32 %v245, %v248
        %v250 = vsub.f32 %v245, %v249
        %v251 = vmul.f32 %v250, 1.442695
        %v252 = vpow.pop %v251
        %254 = vset.pattern.permute.xlu0 0
        %255 = vperm.xlu0 %254, %v249
        %v256 = vpop.permute.xlu0 %255
        %v258 = vsub.f32 %v242, %v256
        %v259 = vsub.f32 %v243, %v256
        %v260 = vmul.f32 %v258, 1.442695
        %v261 = vpow.pop %v260
        %v262 = vmul.f32 %v259, 1.442695
        %v263 = vpow.pop %v262
        %v264 = vld [vmem:[#allocation3] sm:$0xff]
        %v265 = vmul.f32 %v252, %v264
        %v266 = vadd.f32 %v261, %v263
        %267 = vadd.xlane.f32.xlu0 %v266
        %v268 = vpop.xlane.xlu0 %267
        %v269 = vadd.f32 %v265, %v268
        %vm270 = vcmask 7168
        %271 = vst.msk [vmem:[#allocation3] sm:$0xff] %vm270, %v269
        %v273 = vcombine.high %v244, %v244
        %275 = vmatprep.subr.mxu0 0.0
        %276 = vmatpush1.xpose.msra.mxu0 0.0
        %277 = vmatprep.subr.mxu0 0.0
        %278 = vmatpush1.xpose.msra.mxu0 0.0
        %279 = vmatprep.subr.mxu0 0.0
        %280 = vmatpush1.xpose.msra.mxu0 0.0
        %281 = vmatprep.subr.mxu0 0.0
        %282 = vmatpush1.xpose.msra.mxu0 0.0
        %283 = vmatprep.subr.mxu0 0.0
        %284 = vmatpush1.xpose.msra.mxu0 0.0
        %285 = vmatprep.subr.mxu0 0.0
        %286 = vmatpush1.xpose.msra.mxu0 0.0
        %287 = vmatprep.subr.mxu0 0.0
        %288 = vmatpush1.xpose.msra.mxu0 0.0
        %289 = vmatprep.subr.mxu0 0.0
        %290 = vmatpush1.xpose.msra.mxu0 0.0
        %291 = vmatprep.subr.mxu0 0.0
        %292 = vmatpush1.xpose.msra.mxu0 0.0
        %293 = vmatprep.subr.mxu0 0.0
        %294 = vmatpush1.xpose.msra.mxu0 0.0
        %295 = vmatprep.subr.mxu0 0.0
        %296 = vmatpush1.xpose.msra.mxu0 0.0
        %297 = vmatprep.subr.mxu0 0.0
        %298 = vmatpush1.xpose.msra.mxu0 0.0
        %299 = vmatprep.subr.mxu0 0.0
        %300 = vmatpush1.xpose.msra.mxu0 0.0
        %301 = vmatprep.subr.mxu0 0.0
        %302 = vmatpush1.xpose.msra.mxu0 0.0
        %303 = vmatprep.subr.mxu0 0.0
        %304 = vmatpush1.xpose.msra.mxu0 0.0
        %305 = vmatprep.subr.mxu0 %v263
        %306 = vmatpush1.xpose.msra.mxu0 %v261
        %307 = vmatprep.subr.mxu0 0.0
        %308 = vmatpush2.xpose.msra.mxu0 0.0
        %309 = vmatprep.subr.mxu0 0.0
        %310 = vmatpush2.xpose.msra.mxu0 0.0
        %311 = vmatprep.subr.mxu0 0.0
        %312 = vmatpush2.xpose.msra.mxu0 0.0
        %313 = vmatprep.subr.mxu0 0.0
        %314 = vmatpush2.xpose.msra.mxu0 0.0
        %315 = vmatprep.subr.mxu0 0.0
        %316 = vmatpush2.xpose.msra.mxu0 0.0
        %317 = vmatprep.subr.mxu0 0.0
        %318 = vmatpush2.xpose.msra.mxu0 0.0
        %319 = vmatprep.subr.mxu0 0.0
        %320 = vmatpush2.xpose.msra.mxu0 0.0
        %321 = vmatprep.subr.mxu0 0.0
        %322 = vmatpush2.xpose.msra.mxu0 0.0
        %323 = vmatprep.subr.mxu0 0.0
        %324 = vmatpush2.xpose.msra.mxu0 0.0
        %325 = vmatprep.subr.mxu0 0.0
        %326 = vmatpush2.xpose.msra.mxu0 0.0
        %327 = vmatprep.subr.mxu0 0.0
        %328 = vmatpush2.xpose.msra.mxu0 0.0
        %329 = vmatprep.subr.mxu0 0.0
        %330 = vmatpush2.xpose.msra.mxu0 0.0
        %331 = vmatprep.subr.mxu0 0.0
        %332 = vmatpush2.xpose.msra.mxu0 0.0
        %333 = vmatprep.subr.mxu0 0.0
        %334 = vmatpush2.xpose.msra.mxu0 0.0
        %335 = vmatprep.subr.mxu0 0.0
        %336 = vmatpush2.xpose.msra.mxu0 0.0
        %337 = vmatprep.subr.mxu0 0.0
        %338 = vmatpush2.xpose.msra.mxu0 0.0
        %339 = vmatprep.mubr.f32.mxu0 %v273
        %340 = vmatmul.mubr.f32.gmra.mxu0 %v244
        %v341 = vpop.f32.mrf.mxu0
        %v342 = vadd.f32 0.0, %v341
        %v343 = vpop.f32.mrf.mxu0
        %344 = vdwg.mxu0
        %v345 = vld [vmem:[#allocation4] sm:$0xf]
        %346 = vxpose.xlu0.b32.start [1/16] %v252, 128
        %347 = vxpose.xlu0.b32.cont [2/16] 0.0, 128
        %348 = vxpose.xlu0.b32.cont [3/16] 0.0, 128
        %349 = vxpose.xlu0.b32.cont [4/16] 0.0, 128
        %350 = vxpose.xlu0.b32.cont [5/16] 0.0, 128
        %351 = vxpose.xlu0.b32.cont [6/16] 0.0, 128
        %352 = vxpose.xlu0.b32.cont [7/16] 0.0, 128
        %353 = vxpose.xlu0.b32.cont [8/16] 0.0, 128
        %354 = vxpose.xlu0.b32.cont [9/16] 0.0, 128
        %355 = vxpose.xlu0.b32.cont [10/16] 0.0, 128
        %356 = vxpose.xlu0.b32.cont [11/16] 0.0, 128
        %357 = vxpose.xlu0.b32.cont [12/16] 0.0, 128
        %358 = vxpose.xlu0.b32.cont [13/16] 0.0, 128
        %359 = vxpose.xlu0.b32.cont [14/16] 0.0, 128
        %360 = vxpose.xlu0.b32.cont [15/16] 0.0, 128
        %361 = vxpose.xlu0.b32.end [16/16] 0.0, 128
        %v362 = vpop.trf.xlu0
        %v363 = vpop.trf.xlu0
        %v364 = vpop.trf.xlu0
        %v365 = vpop.trf.xlu0
        %v366 = vpop.trf.xlu0
        %v367 = vpop.trf.xlu0
        %v368 = vpop.trf.xlu0
        %v369 = vpop.trf.xlu0
        %v370 = vpop.trf.xlu0
        %v371 = vpop.trf.xlu0
        %v372 = vpop.trf.xlu0
        %v373 = vpop.trf.xlu0
        %v374 = vpop.trf.xlu0
        %v375 = vpop.trf.xlu0
        %v376 = vpop.trf.xlu0
        %v377 = vpop.trf.xlu0
        %v378 = vlaneseq
        %v379 = vshrl.u32 %v378, 7
        %v380 = vsub.s32 0, %v379
        %v381 = vrot.slane %v362, %v380
        %v382 = vmul.f32 %v345, %v381
        %v383 = vadd.f32 %v382, %v342
        %vm384 = vcmask 60416
        %385 = vst.msk [vmem:[#allocation4] sm:$0xf] %vm384, %v383
        %386 = vst.msk [vmem:[#allocation2] sm:$0xff] %vm270, %v249
        // Predicated region
        $region41: #{tpu_custom_call.1} parent=27 // pred_check
          %p387 = pneg %p233
        $region42: #{tpu_custom_call.1} parent=27 // pred_check_branch
          %389 = sbr.rel (%p387) target = $region44
        $region43: #{tpu_custom_call.1} parent=27 // pred_region
          %v390 = vld [vmem:[#allocation3] sm:$0xff]
          %v391 = vrcp.pop %v390
          %v392 = vld [vmem:[#allocation4] sm:$0xf]
          %393 = vxpose.xlu0.b32.start [1/16] %v391, 128
          %394 = vxpose.xlu0.b32.cont [2/16] 0.0, 128
          %395 = vxpose.xlu0.b32.cont [3/16] 0.0, 128
          %396 = vxpose.xlu0.b32.cont [4/16] 0.0, 128
          %397 = vxpose.xlu0.b32.cont [5/16] 0.0, 128
          %398 = vxpose.xlu0.b32.cont [6/16] 0.0, 128
          %399 = vxpose.xlu0.b32.cont [7/16] 0.0, 128
          %400 = vxpose.xlu0.b32.cont [8/16] 0.0, 128
          %401 = vxpose.xlu0.b32.cont [9/16] 0.0, 128
          %402 = vxpose.xlu0.b32.cont [10/16] 0.0, 128
          %403 = vxpose.xlu0.b32.cont [11/16] 0.0, 128
          %404 = vxpose.xlu0.b32.cont [12/16] 0.0, 128
          %405 = vxpose.xlu0.b32.cont [13/16] 0.0, 128
          %406 = vxpose.xlu0.b32.cont [14/16] 0.0, 128
          %407 = vxpose.xlu0.b32.cont [15/16] 0.0, 128
          %408 = vxpose.xlu0.b32.end [16/16] 0.0, 128
          %v409 = vpop.trf.xlu0
          %v410 = vpop.trf.xlu0
          %v411 = vpop.trf.xlu0
          %v412 = vpop.trf.xlu0
          %v413 = vpop.trf.xlu0
          %v414 = vpop.trf.xlu0
          %v415 = vpop.trf.xlu0
          %v416 = vpop.trf.xlu0
          %v417 = vpop.trf.xlu0
          %v418 = vpop.trf.xlu0
          %v419 = vpop.trf.xlu0
          %v420 = vpop.trf.xlu0
          %v421 = vpop.trf.xlu0
          %v422 = vpop.trf.xlu0
          %v423 = vpop.trf.xlu0
          %v424 = vpop.trf.xlu0
          %v425 = vlaneseq
          %v426 = vshrl.u32 %v425, 7
          %v427 = vsub.s32 0, %v426
          %v428 = vrot.slane %v409, %v427
          %v429 = vmul.f32 %v392, %v428
          %430 = vst.msk [vmem:[%s230] sm:$0xf] %vm384, %v429
        $region44: #{tpu_custom_call.1} parent=27 // pred_fallthru
          _
        %s431 = sand.u32 %s109, 1
        %s432 = scalar_lea.sflag [#allocation7], %s431
        %s433 = sand.u32 %s109, 1
        %s434 = smul.addr %s433, 4
        %s435 = scalar_lea.vmem [#allocation10], %s434
        // Predicated region
        $region45: #{tpu_custom_call.1} parent=27 // pred_check
          %p436 = pneg %p119
        $region46: #{tpu_custom_call.1} parent=27 // pred_check_branch
          %438 = sbr.rel (%p436) target = $region48
        $region47: #{tpu_custom_call.1} parent=27 // pred_region
          %s440 = ssub.s32 64, 64
          %441 = vsyncadd %s432, %s440
          %s442 = sadd.s32 %s28, %s27
          %s443 = smul.addr %s442, 64
          %s444 = scalar_lea.hbm %s2, %s443
          %s446 = sshll.u32 %s435, 4
          %s447 = int_to_ptr.vmem [resolvable:$true] %s446
          %449 = dma.vmem_to_hbm [thread:$0]  %s447, 64, %s444, %s432
        $region48: #{tpu_custom_call.1} parent=27 // pred_fallthru
          _
      $region28: #{tpu_custom_call.1} parent=5 // pred_fallthru
        _
      %p450 = scmp.le.s32.totalorder 2, %s17
      // Predicated region
      $region49: #{tpu_custom_call.1} parent=5 // pred_check
        %p451 = pneg %p450
      $region50: #{tpu_custom_call.1} parent=5 // pred_check_branch
        %453 = sbr.rel (%p451) target = $region52
      $region51: #{tpu_custom_call.1} parent=5 // pred_region
        %s454 = ssub.s32 %s17, 2
        // Predicated region
        $region53: #{tpu_custom_call.1} parent=51 // pred_check
          %p455 = pneg %p125
        $region54: #{tpu_custom_call.1} parent=51 // pred_check_branch
          %457 = sbr.rel (%p455) target = $region56
        $region55: #{tpu_custom_call.1} parent=51 // pred_region
          %s458 = sand.u32 %s110, 1
          %s459 = scalar_lea.sflag [#allocation7], %s458
          %s460 = sand.u32 %s110, 1
          %s461 = smul.addr %s460, 4
          %s462 = scalar_lea.vmem [#allocation10], %s461
          %463 = dma.done %s459, 64
        $region56: #{tpu_custom_call.1} parent=51 // pred_fallthru
          _
      $region52: #{tpu_custom_call.1} parent=5 // pred_fallthru
        _
    $region6: #{tpu_custom_call.1} parent=1 // loop_footer
      %s21 = sadd.s32 1, %s17
    $region7: #{tpu_custom_call.1} parent=1 // loop_footer_branch
      %16 = sbr.rel target = $region3
    $region8: #{tpu_custom_call.1} parent=1 // loop_exit
      _
    %464 = vsyncpa [#allocation6], 1
    %s465 = scalar_lea.sflag [#allocation6], 1
    %466 = vsyncpa %s465, 1
    %467 = vsyncpa [#allocation9], 1
    %s468 = scalar_lea.sflag [#allocation9], 1
    %469 = vsyncpa %s468, 1
    %470 = vsyncpa [#allocation7], 1
    %s471 = scalar_lea.sflag [#allocation7], 1
    %472 = vsyncpa %s471, 1

</llo_original>
